<compile_context>
chip_gen: v5e
topology: v5e:2x2
jax: 0.10.0
libtpu: 0.0.40
codegen_flags: <defaults>
</compile_context>

<pallas_src>
import numpy as np
import jax
import jax.numpy as jnp
from jax.experimental import pallas as pl
from jax.experimental.pallas import tpu as pltpu


def _round_up(v, m):
    return (v + m - 1) // m * m


def _pick_tile(n, c_pad, h_pad, vmem_budget=24 * 1024 * 1024):
    """Largest node-dim tile (multiple of 128, <= 1024) whose double-buffered
    working set fits comfortably in VMEM."""
    n128 = _round_up(max(n, 1), 128)
    for tile in (1024, 512, 256, 128):
        if tile > n128:
            continue
        need = (
            2 * tile * tile * 2        # adjacency tile (bf16), double-buffered
            + 2 * tile * c_pad * 2     # x tile (bf16), double-buffered
            + 2 * tile * 4             # inv_deg tile (f32)
            + 2 * c_pad * h_pad * 2    # weight (bf16, constant block index)
            + 2 * tile * h_pad * 4     # output tile (f32)
            + tile * c_pad * 4         # f32 accumulator scratch
        )
        if need <= vmem_budget:
            return tile
    return min(128, n128)


def sage_kernel(kblk_ref, nnz_ref, a_ref, x_ref, inv_deg_ref, wt_ref, o_ref, acc_ref):
    i = pl.program_id(0)   # output row block (target nodes)
    t = pl.program_id(1)   # position in this row block's non-empty K schedule

    @pl.when(t == 0)
    def _init():
        acc_ref[...] = jnp.zeros_like(acc_ref)

    # Accumulate neighbor-feature sums: acc += A_blk @ x_blk (bf16 MXU, f32 accumulate).
    # Skipped for padded schedule slots (t >= nnz for this row block).
    @pl.when(t < nnz_ref[i])
    def _accumulate():
        acc_ref[...] += jnp.dot(a_ref[...], x_ref[...],
                                preferred_element_type=jnp.float32)

    # Finalize: mean (f32 degree normalization) fused with the linear layer (bf16 MXU).
    @pl.when(t == pl.num_programs(1) - 1)
    def _finalize():
        agg = (acc_ref[...] * inv_deg_ref[...]).astype(jnp.bfloat16)
        o_ref[...] = jnp.dot(agg, wt_ref[...],
                             preferred_element_type=jnp.float32).astype(o_ref.dtype)


def graphsage_forward(x, edge_index, weight):
    """x: [N, C] f32, edge_index: [2, E] int32 (row0 = src j, row1 = dst i),
    weight: [H, C] f32 (PyTorch Linear layout).  Returns [N, H] f32."""
    n, c = x.shape
    h = weight.shape[0]

    # ---- tiling / padding (lane-dense: channel dims padded to 128) ----
    c_pad = _round_up(c, 128)
    h_pad = _round_up(h, 128)
    tile = _pick_tile(n, c_pad, h_pad)             # node-dim tile, MXU/lane aligned
    n_pad = _round_up(n, tile)
    num_m = n_pad // tile

    # ---- block-sparse schedule (tiny, host side): non-empty (dst-block, src-block) ----
    src_np = np.asarray(edge_index[0])
    dst_np = np.asarray(edge_index[1])
    kblocks = [set() for _ in range(num_m)]
    for s_b, d_b in zip(src_np // tile, dst_np // tile):
        kblocks[int(d_b)].add(int(s_b))
    max_nnz = max(1, max((len(b) for b in kblocks), default=1))
    kblk = np.zeros((num_m, max_nnz), dtype=np.int32)
    nnz = np.zeros((num_m,), dtype=np.int32)
    for i, blocks in enumerate(kblocks):
        blocks = sorted(blocks)
        nnz[i] = len(blocks)
        fill = blocks[-1] if blocks else 0        # repeat last block -> revisit, no extra DMA
        for t in range(max_nnz):
            kblk[i, t] = blocks[t] if t < len(blocks) else fill

    # ---- device operands ----
    src = jnp.asarray(edge_index[0], jnp.int32)
    dst = jnp.asarray(edge_index[1], jnp.int32)
    # Binary adjacency (duplicate edges counted, matching PyG mean); exact in bf16.
    adj = jnp.zeros((n_pad, n_pad), jnp.float32).at[dst, src].add(1.0)
    deg = adj.sum(axis=1, keepdims=True)
    inv_deg = 1.0 / jnp.maximum(deg, 1.0)                              # [n_pad, 1] f32
    a_bf16 = adj.astype(jnp.bfloat16)
    x_pad = jnp.zeros((n_pad, c_pad), jnp.bfloat16).at[:n, :c].set(
        x.astype(jnp.bfloat16))
    wt_pad = jnp.zeros((c_pad, h_pad), jnp.bfloat16).at[:c, :h].set(
        weight.T.astype(jnp.bfloat16))

    out_pad = pl.pallas_call(
        sage_kernel,
        out_shape=jax.ShapeDtypeStruct((n_pad, h_pad), jnp.float32),
        grid_spec=pltpu.PrefetchScalarGridSpec(
            num_scalar_prefetch=2,
            grid=(num_m, max_nnz),
            in_specs=[
                pl.BlockSpec((tile, tile), lambda i, t, kb, nz: (i, kb[i, t])),
                pl.BlockSpec((tile, c_pad), lambda i, t, kb, nz: (kb[i, t], 0)),
                pl.BlockSpec((tile, 1), lambda i, t, kb, nz: (i, 0)),
                pl.BlockSpec((c_pad, h_pad), lambda i, t, kb, nz: (0, 0)),
            ],
            out_specs=pl.BlockSpec((tile, h_pad), lambda i, t, kb, nz: (i, 0)),
            scratch_shapes=[pltpu.VMEM((tile, c_pad), jnp.float32)],
        ),
        compiler_params=pltpu.CompilerParams(
            dimension_semantics=("parallel", "arbitrary"),
            vmem_limit_bytes=32 * 1024 * 1024,
        ),
    )(jnp.asarray(kblk), jnp.asarray(nnz), a_bf16, x_pad, inv_deg, wt_pad)

    return out_pad[:n, :h]


def reference_forward(x, edge_index, weight):
    """Pure-JAX f32 reference: scatter-mean over incoming edges, then linear."""
    n = x.shape[0]
    src, dst = edge_index[0], edge_index[1]
    summed = jnp.zeros((n, x.shape[1]), jnp.float32).at[dst].add(x[src])
    count = jnp.zeros((n,), jnp.float32).at[dst].add(1.0)
    agg = summed / jnp.maximum(count, 1.0)[:, None]
    return agg @ weight.T


def reference_forward_bf16(x, edge_index, weight):
    """Same math with the kernel's bf16-input / f32-accumulate quantization applied."""
    n, c = x.shape
    xb = x.astype(jnp.bfloat16).astype(jnp.float32)
    wb = weight.astype(jnp.bfloat16).astype(jnp.float32)
    src, dst = edge_index[0], edge_index[1]
    summed = jnp.zeros((n, c), jnp.float32).at[dst].add(xb[src])
    count = jnp.zeros((n,), jnp.float32).at[dst].add(1.0)
    agg = summed / jnp.maximum(count, 1.0)[:, None]
    aggb = agg.astype(jnp.bfloat16).astype(jnp.float32)
    return aggb @ wb.T


if __name__ == "__main__":
    key = jax.random.PRNGKey(0)
    k_x, k_e, k_w = jax.random.split(key, 3)

    N = 64            # number of nodes
    C_IN = 16         # in_channels
    H_OUT = 32        # hidden_channels
    E = 256           # number of edges

    x = jax.random.normal(k_x, (N, C_IN), dtype=jnp.float32)
    edge_index = jax.random.randint(k_e, (2, E), 0, N, dtype=jnp.int32)

    # Deterministic Glorot-uniform-style init for lin_l weight [H_OUT, C_IN]
    limit = (6.0 / (C_IN + H_OUT)) ** 0.5
    weight = jax.random.uniform(k_w, (H_OUT, C_IN), dtype=jnp.float32,
                                minval=-limit, maxval=limit)

    out = jax.block_until_ready(graphsage_forward(x, edge_index, weight))
    assert out.shape == (N, H_OUT)

    # Tight check against a reference with matching bf16 input quantization.
    ref_q = jax.block_until_ready(reference_forward_bf16(x, edge_index, weight))
    assert jnp.allclose(out, ref_q, atol=1e-2, rtol=1e-2), "mismatch vs bf16-matched reference"

    # Loose check against the exact f32 module semantics (bf16 input rounding only).
    ref = jax.block_until_ready(reference_forward(x, edge_index, weight))
    assert jnp.allclose(out, ref, atol=5e-2, rtol=5e-2), "mismatch vs f32 reference"

    print("KERNEL_OK")
</pallas_src>

<mosaic_0001>
module attributes {stable_mosaic.version = 11 : i64} {
  func.func @sage_kernel(%arg0: i32, %arg1: i32, %arg2: memref<1x1xi32, #tpu.memory_space<smem>>, %arg3: memref<1xi32, #tpu.memory_space<smem>>, %arg4: memref<128x128xbf16, #tpu.memory_space<vmem>>, %arg5: memref<128x128xbf16, #tpu.memory_space<vmem>>, %arg6: memref<128x1xf32, #tpu.memory_space<vmem>>, %arg7: memref<128x128xbf16, #tpu.memory_space<vmem>>, %arg8: memref<128x128xf32, #tpu.memory_space<vmem>>, %arg9: memref<128x128xf32, #tpu.memory_space<vmem>>) attributes {dimension_semantics = [#tpu.dimension_semantics<parallel>, #tpu.dimension_semantics<arbitrary>], iteration_bounds = array<i64: 1, 1>, scalar_prefetch = 2 : i64, scratch_operands = 1 : i64, tpu.core_type = #tpu.core_type<tc>, window_params = [{transform_indices = @transform_0, window_bounds = array<i64: 128, 128>}, {transform_indices = @transform_1, window_bounds = array<i64: 128, 128>}, {transform_indices = @transform_2, window_bounds = array<i64: 128, 1>}, {pipeline_mode = #tpu.pipeline_mode<synchronous>, transform_indices = @transform_3, window_bounds = array<i64: 128, 128>}, {transform_indices = @transform_4, window_bounds = array<i64: 128, 128>}]} {
    %c0_i32 = arith.constant 0 : i32
    %0 = arith.cmpi eq, %arg1, %c0_i32 : i32
    %1 = arith.extui %0 : i1 to i32
    %c0_i32_0 = arith.constant 0 : i32
    %2 = arith.cmpi ne, %1, %c0_i32_0 : i32
    scf.if %2 {
      %cst = arith.constant 0.000000e+00 : f32
      %11 = vector.broadcast %cst : f32 to vector<128x128xf32>
      %c0 = arith.constant 0 : index
      %c0_4 = arith.constant 0 : index
      %12 = vector.load %arg9[%c0, %c0_4] : memref<128x128xf32, #tpu.memory_space<vmem>>, vector<128x128xf32>
      tpu.vector_store %arg9[%c0, %c0_4], %11 {strides = array<i32>} : memref<128x128xf32, #tpu.memory_space<vmem>>, vector<128x128xf32>,
    } else {
    }
    %3 = arith.index_cast %arg0 : i32 to index
    %4 = memref.load %arg3[%3] : memref<1xi32, #tpu.memory_space<smem>>
    %5 = arith.cmpi slt, %arg1, %4 : i32
    %6 = arith.extui %5 : i1 to i32
    %c0_i32_1 = arith.constant 0 : i32
    %7 = arith.cmpi ne, %6, %c0_i32_1 : i32
    scf.if %7 {
      %c0 = arith.constant 0 : index
      %c0_4 = arith.constant 0 : index
      %11 = vector.load %arg9[%c0, %c0_4] : memref<128x128xf32, #tpu.memory_space<vmem>>, vector<128x128xf32>
      %c0_5 = arith.constant 0 : index
      %c0_6 = arith.constant 0 : index
      %12 = vector.load %arg4[%c0_5, %c0_6] : memref<128x128xbf16, #tpu.memory_space<vmem>>, vector<128x128xbf16>
      %c0_7 = arith.constant 0 : index
      %c0_8 = arith.constant 0 : index
      %13 = vector.load %arg5[%c0_7, %c0_8] : memref<128x128xbf16, #tpu.memory_space<vmem>>, vector<128x128xbf16>
      %cst = arith.constant dense<0.000000e+00> : vector<128x128xf32>
      %14 = tpu.matmul %12, %13, %cst {dimension_numbers = #tpu.dot_dimension_numbers<[1], [0], [0], [1], [0, 0, 1, 1], [], []>} : vector<128x128xbf16>, vector<128x128xbf16>, vector<128x128xf32> -> vector<128x128xf32>
      %15 = arith.addf %11, %14 : vector<128x128xf32>
      %c0_9 = arith.constant 0 : index
      %c0_10 = arith.constant 0 : index
      %16 = vector.load %arg9[%c0_9, %c0_10] : memref<128x128xf32, #tpu.memory_space<vmem>>, vector<128x128xf32>
      tpu.vector_store %arg9[%c0_9, %c0_10], %15 {strides = array<i32>} : memref<128x128xf32, #tpu.memory_space<vmem>>, vector<128x128xf32>,
    } else {
    }
    %c0_i32_2 = arith.constant 0 : i32
    %8 = arith.cmpi eq, %arg1, %c0_i32_2 : i32
    %9 = arith.extui %8 : i1 to i32
    %c0_i32_3 = arith.constant 0 : i32
    %10 = arith.cmpi ne, %9, %c0_i32_3 : i32
    scf.if %10 {
      %c0 = arith.constant 0 : index
      %c0_4 = arith.constant 0 : index
      %11 = vector.load %arg9[%c0, %c0_4] : memref<128x128xf32, #tpu.memory_space<vmem>>, vector<128x128xf32>
      %c0_5 = arith.constant 0 : index
      %c0_6 = arith.constant 0 : index
      %12 = vector.load %arg6[%c0_5, %c0_6] : memref<128x1xf32, #tpu.memory_space<vmem>>, vector<128x1xf32>
      %13 = vector.broadcast %12 : vector<128x1xf32> to vector<128x128xf32>
      %14 = arith.mulf %11, %13 : vector<128x128xf32>
      %15 = arith.truncf %14 : vector<128x128xf32> to vector<128x128xbf16>
      %c0_7 = arith.constant 0 : index
      %c0_8 = arith.constant 0 : index
      %16 = vector.load %arg7[%c0_7, %c0_8] : memref<128x128xbf16, #tpu.memory_space<vmem>>, vector<128x128xbf16>
      %cst = arith.constant dense<0.000000e+00> : vector<128x128xf32>
      %17 = tpu.matmul %15, %16, %cst {dimension_numbers = #tpu.dot_dimension_numbers<[1], [0], [0], [1], [0, 0, 1, 1], [], []>} : vector<128x128xbf16>, vector<128x128xbf16>, vector<128x128xf32> -> vector<128x128xf32>
      %c0_9 = arith.constant 0 : index
      %c0_10 = arith.constant 0 : index
      %18 = vector.load %arg8[%c0_9, %c0_10] : memref<128x128xf32, #tpu.memory_space<vmem>>, vector<128x128xf32>
      tpu.vector_store %arg8[%c0_9, %c0_10], %17 {strides = array<i32>} : memref<128x128xf32, #tpu.memory_space<vmem>>, vector<128x128xf32>,
    } else {
    }
    return
  }
  func.func @transform_0(%arg0: i32, %arg1: i32, %arg2: memref<1x1xi32, #tpu.memory_space<smem>>, %arg3: memref<1xi32, #tpu.memory_space<smem>>) -> (i32, i32) {
    %0 = arith.index_cast %arg0 : i32 to index
    %1 = arith.index_cast %arg1 : i32 to index
    %2 = memref.load %arg2[%0, %1] : memref<1x1xi32, #tpu.memory_space<smem>>
    %c0_i32 = arith.constant 0 : i32
    return %arg0, %2 : i32, i32
  }
  func.func @transform_1(%arg0: i32, %arg1: i32, %arg2: memref<1x1xi32, #tpu.memory_space<smem>>, %arg3: memref<1xi32, #tpu.memory_space<smem>>) -> (i32, i32) {
    %0 = arith.index_cast %arg0 : i32 to index
    %1 = arith.index_cast %arg1 : i32 to index
    %2 = memref.load %arg2[%0, %1] : memref<1x1xi32, #tpu.memory_space<smem>>
    %c0_i32 = arith.constant 0 : i32
    %c0_i32_0 = arith.constant 0 : i32
    return %2, %c0_i32 : i32, i32
  }
  func.func @transform_2(%arg0: i32, %arg1: i32, %arg2: memref<1x1xi32, #tpu.memory_space<smem>>, %arg3: memref<1xi32, #tpu.memory_space<smem>>) -> (i32, i32) {
    %c0_i32 = arith.constant 0 : i32
    %c0_i32_0 = arith.constant 0 : i32
    return %arg0, %c0_i32 : i32, i32
  }
  func.func @transform_3(%arg0: i32, %arg1: i32, %arg2: memref<1x1xi32, #tpu.memory_space<smem>>, %arg3: memref<1xi32, #tpu.memory_space<smem>>) -> (i32, i32) {
    %c0_i32 = arith.constant 0 : i32
    %c0_i32_0 = arith.constant 0 : i32
    %c0_i32_1 = arith.constant 0 : i32
    return %c0_i32, %c0_i32_0 : i32, i32
  }
  func.func @transform_4(%arg0: i32, %arg1: i32, %arg2: memref<1x1xi32, #tpu.memory_space<smem>>, %arg3: memref<1xi32, #tpu.memory_space<smem>>) -> (i32, i32) {
    %c0_i32 = arith.constant 0 : i32
    %c0_i32_0 = arith.constant 0 : i32
    return %arg0, %c0_i32 : i32, i32
  }
}

</mosaic_0001>

<llo_original>
// kernel: tpu_custom_call.1
$region0: #{tpu_custom_call.1}
  #allocation0 [shape = 'u32[]', space=smem, size = 0x4, offset = 0x4, fixed_abs, tag = 'smem constant byte address 0x4 - core index']
  #allocation1 [shape = 'u32[72,128]{1,0:T(1,128)}', space=vmem, size = 0x9000, scoped, tag = 'internal scratch']
  #allocation2 [shape = 'f32[128,128]{1,0:T(8,128)}', space=vmem, size = 0x10000, scoped, tag = 'scratch operand']
  #allocation3 [shape = 's32[1]{0}', space=sflag, size = 0x4, scoped, tag = 'scoped memory for tpu_custom_call.1']
  #allocation4 [shape = 's32[1,1]{1,0:T(1,128)S(6)}', space=smem, size = 0x200, scoped, tag = 'prefetched SMEM operand 0']
  #allocation5 [shape = 's32[1]{0:T(128)S(6)}', space=smem, size = 0x200, scoped, tag = 'prefetched SMEM operand 1']
  %s0 = inlined_call_operand.<no memory space> [shape: s32[1,1], index: 0, kind: input, shape index: {}]
  %s1 = inlined_call_operand.<no memory space> [shape: s32[1], index: 1, kind: input, shape index: {}]
  %s2 = inlined_call_operand.vmem [shape: bf16[128,128], index: 2, kind: input, shape index: {}]
  %s3 = inlined_call_operand.vmem [shape: bf16[128,128], index: 3, kind: input, shape index: {}]
  %s4 = inlined_call_operand.vmem [shape: f32[128,1], index: 4, kind: input, shape index: {}]
  %s5 = inlined_call_operand.hbm [shape: bf16[128,128], index: 5, kind: input, shape index: {}]
  %s6 = inlined_call_operand.hbm [shape: f32[128,128], index: 6, kind: output, shape index: {}]
  %s7 = sld [smem:[#allocation0]]
  $region42: #{tpu_custom_call.1} parent=0
    _
  %s9 = ssub.s32 1, %s7
  %s10 = scalar_select 0, %s9, %s7
  %11 = sst [smem:[#allocation4]] %s0
  %12 = sst [smem:[#allocation5]] %s1
  $region1: #{tpu_custom_call.1} parent=0
    #allocation6 [shape = 'u8[32768]{0}', space=vmem, size = 0x8000, scoped, tag = 'input window, operand 5, single buffered']
    #allocation7 [shape = 's32[1]{0}', space=sflag, size = 0x4, scoped, tag = 'scoped memory for tpu_custom_call.1']
    #allocation8 [shape = 's32[1]{0}', space=sflag, size = 0x4, scoped, tag = 'scoped memory for tpu_custom_call.1']
    #allocation9 [shape = 'u8[65536]{0}', space=vmem, size = 0x10000, scoped, tag = 'output window, operand 0, single buffered']
    %13 = vsyncpa [#allocation7], 0
    %14 = vsyncpa [#allocation8], 0
    // Predicated region
    $region2: #{tpu_custom_call.1} parent=1 // pred_check
      _
    $region3: #{tpu_custom_call.1} parent=1 // pred_check_branch
      %16 = sbr.rel (0) target = $region5
    $region4: #{tpu_custom_call.1} parent=1 // pred_region
      %s17 = sadd.s32 0, 0
      %s18 = smul.u32 %s17, 128
      %s19 = sadd.s32 %s18, 0
      %s20 = sld [smem:[#allocation4 + %s19]]
      %p21 = scmp.lt.s32.totalorder %s20, 0
      %s22 = scalar_select %p21, %s20, 0
      %s23 = smul.addr %s22, 4
      %s24 = scalar_lea.vmem %s2, %s23
      %s25 = sadd.s32 0, 0
      %s26 = smul.u32 %s25, 128
      %s27 = sadd.s32 %s26, 0
      %s28 = sld [smem:[#allocation4 + %s27]]
    $region5: #{tpu_custom_call.1} parent=1 // pred_fallthru
      _
    // Predicated region
    $region6: #{tpu_custom_call.1} parent=1 // pred_check
      _
    $region7: #{tpu_custom_call.1} parent=1 // pred_check_branch
      %30 = sbr.rel (0) target = $region9
    $region8: #{tpu_custom_call.1} parent=1 // pred_region
      %s31 = sadd.s32 0, 0
      %s32 = smul.u32 %s31, 128
      %s33 = sadd.s32 %s32, 0
      %s34 = sld [smem:[#allocation4 + %s33]]
      %s35 = smul.u32 16, %s34
      %p36 = scmp.lt.s32.totalorder %s35, 15
      %s37 = scalar_select %p36, %s35, 15
      %s38 = smul.addr %s37, 4
      %s39 = scalar_lea.vmem %s3, %s38
      %s40 = sadd.s32 0, 0
      %s41 = smul.u32 %s40, 128
      %s42 = sadd.s32 %s41, 0
      %s43 = sld [smem:[#allocation4 + %s42]]
      %s44 = smul.u32 16, %s43
    $region9: #{tpu_custom_call.1} parent=1 // pred_fallthru
      _
    // Predicated region
    $region10: #{tpu_custom_call.1} parent=1 // pred_check
      _
    $region11: #{tpu_custom_call.1} parent=1 // pred_check_branch
      %46 = sbr.rel (0) target = $region13
    $region12: #{tpu_custom_call.1} parent=1 // pred_region
      _
    $region13: #{tpu_custom_call.1} parent=1 // pred_fallthru
      _
    // Predicated region
    $region14: #{tpu_custom_call.1} parent=1 // pred_check
      _
    $region15: #{tpu_custom_call.1} parent=1 // pred_check_branch
      %48 = sbr.rel (0) target = $region17
    $region16: #{tpu_custom_call.1} parent=1 // pred_region
      %50 = vsyncadd [#allocation7], 0
      %s51 = sshll.u32 %s5, 4
      %s52 = int_to_ptr.hbm [resolvable:$true] %s51
      %s53 = sshll.u32 [#allocation6], 4
      %s54 = int_to_ptr.vmem [resolvable:$true] %s53
      %59 = dma.hbm_to_vmem [thread:$0]  %s52, 1024, %s54, [#allocation7], 64, 64, 4
    $region17: #{tpu_custom_call.1} parent=1 // pred_fallthru
      _
    // Predicated region
    $region18: #{tpu_custom_call.1} parent=1 // pred_check
      _
    $region19: #{tpu_custom_call.1} parent=1 // pred_check_branch
      %61 = sbr.rel (0) target = $region21
    $region20: #{tpu_custom_call.1} parent=1 // pred_region
      %63 = dma.done [#allocation7], 1024
    $region21: #{tpu_custom_call.1} parent=1 // pred_fallthru
      _
    %s64 = sadd.s32 0, 0
    %s65 = smul.u32 %s64, 128
    %s66 = sadd.s32 %s65, 0
    %s67 = sld [smem:[#allocation4 + %s66]]
    %p68 = scmp.lt.s32.totalorder %s67, 0
    %s69 = scalar_select %p68, %s67, 0
    %s70 = smul.addr %s69, 4
    %s71 = scalar_lea.vmem %s2, %s70
    %s72 = sadd.s32 0, 0
    %s73 = smul.u32 %s72, 128
    %s74 = sadd.s32 %s73, 0
    %s75 = sld [smem:[#allocation4 + %s74]]
    %s76 = smul.u32 16, %s75
    %p77 = scmp.lt.s32.totalorder %s76, 15
    %s78 = scalar_select %p77, %s76, 15
    %s79 = smul.addr %s78, 4
    %s80 = scalar_lea.vmem %s3, %s79
    %s81 = sadd.s32 0, 0
    %s82 = smul.u32 %s81, 128
    %s83 = sadd.s32 %s82, 0
    %s84 = sld [smem:[#allocation4 + %s83]]
    %p85 = scmp.lt.s32.totalorder %s84, 0
    %s86 = scalar_select %p85, %s84, 0
    %s87 = smul.addr %s86, 4
    %s88 = scalar_lea.vmem %s2, %s87
    %s89 = sadd.s32 0, 0
    %s90 = smul.u32 %s89, 128
    %s91 = sadd.s32 %s90, 0
    %s92 = sld [smem:[#allocation4 + %s91]]
    %s93 = sadd.s32 0, 0
    %s94 = smul.u32 %s93, 128
    %s95 = sadd.s32 %s94, 0
    %s96 = sld [smem:[#allocation4 + %s95]]
    %s97 = smul.u32 16, %s96
    %p98 = scmp.lt.s32.totalorder %s97, 15
    %s99 = scalar_select %p98, %s97, 15
    %s100 = smul.addr %s99, 4
    %s101 = scalar_lea.vmem %s3, %s100
    %s102 = sadd.s32 0, 0
    %s103 = smul.u32 %s102, 128
    %s104 = sadd.s32 %s103, 0
    %s105 = sld [smem:[#allocation4 + %s104]]
    %s106 = smul.u32 16, %s105
    %p107 = scmp.eq.s32.totalorder 0, 0
    // Predicated region
    $region22: #{tpu_custom_call.1} parent=1 // pred_check
      %p108 = pneg %p107
    $region23: #{tpu_custom_call.1} parent=1 // pred_check_branch
      %110 = sbr.rel (%p108) target = $region25
    $region24: #{tpu_custom_call.1} parent=1 // pred_region
      %111 = vst [vmem:[#allocation2] sm:$0xff] 0.0
      %112 = vst [vmem:[#allocation2 + $0x8] sm:$0xff] 0.0
      %113 = vst [vmem:[#allocation2 + $0x10] sm:$0xff] 0.0
      %114 = vst [vmem:[#allocation2 + $0x18] sm:$0xff] 0.0
      %115 = vst [vmem:[#allocation2 + $0x20] sm:$0xff] 0.0
      %116 = vst [vmem:[#allocation2 + $0x28] sm:$0xff] 0.0
      %117 = vst [vmem:[#allocation2 + $0x30] sm:$0xff] 0.0
      %118 = vst [vmem:[#allocation2 + $0x38] sm:$0xff] 0.0
      %119 = vst [vmem:[#allocation2 + $0x40] sm:$0xff] 0.0
      %120 = vst [vmem:[#allocation2 + $0x48] sm:$0xff] 0.0
      %121 = vst [vmem:[#allocation2 + $0x50] sm:$0xff] 0.0
      %122 = vst [vmem:[#allocation2 + $0x58] sm:$0xff] 0.0
      %123 = vst [vmem:[#allocation2 + $0x60] sm:$0xff] 0.0
      %124 = vst [vmem:[#allocation2 + $0x68] sm:$0xff] 0.0
      %125 = vst [vmem:[#allocation2 + $0x70] sm:$0xff] 0.0
      %126 = vst [vmem:[#allocation2 + $0x78] sm:$0xff] 0.0
    $region25: #{tpu_custom_call.1} parent=1 // pred_fallthru
      _
    %s127 = sld [smem:[#allocation5]]
    %p128 = scmp.lt.s32.totalorder 0, %s127
    // Predicated region
    $region26: #{tpu_custom_call.1} parent=1 // pred_check
      %p129 = pneg %p128
    $region27: #{tpu_custom_call.1} parent=1 // pred_check_branch
      %131 = sbr.rel (%p129) target = $region29
    $region28: #{tpu_custom_call.1} parent=1 // pred_region
      %v132 = vld [vmem:[#allocation2] sm:$0xff]
      %v133 = vld [vmem:[#allocation2 + $0x8] sm:$0xff]
      %v134 = vld [vmem:[#allocation2 + $0x10] sm:$0xff]
      %v135 = vld [vmem:[#allocation2 + $0x18] sm:$0xff]
      %v136 = vld [vmem:[#allocation2 + $0x20] sm:$0xff]
      %v137 = vld [vmem:[#allocation2 + $0x28] sm:$0xff]
      %v138 = vld [vmem:[#allocation2 + $0x30] sm:$0xff]
      %v139 = vld [vmem:[#allocation2 + $0x38] sm:$0xff]
      %v140 = vld [vmem:[#allocation2 + $0x40] sm:$0xff]
      %v141 = vld [vmem:[#allocation2 + $0x48] sm:$0xff]
      %v142 = vld [vmem:[#allocation2 + $0x50] sm:$0xff]
      %v143 = vld [vmem:[#allocation2 + $0x58] sm:$0xff]
      %v144 = vld [vmem:[#allocation2 + $0x60] sm:$0xff]
      %v145 = vld [vmem:[#allocation2 + $0x68] sm:$0xff]
      %v146 = vld [vmem:[#allocation2 + $0x70] sm:$0xff]
      %v147 = vld [vmem:[#allocation2 + $0x78] sm:$0xff]
      %v148 = vld [vmem:[%s88] sm:$0xf]
      %v149 = vld [vmem:[%s88 + $0x4] sm:$0xf]
      %v150 = vld [vmem:[%s88 + $0x8] sm:$0xf]
      %v151 = vld [vmem:[%s88 + $0xc] sm:$0xf]
      %v152 = vld [vmem:[%s88 + $0x10] sm:$0xf]
      %v153 = vld [vmem:[%s88 + $0x14] sm:$0xf]
      %v154 = vld [vmem:[%s88 + $0x18] sm:$0xf]
      %v155 = vld [vmem:[%s88 + $0x1c] sm:$0xf]
      %v156 = vld [vmem:[%s88 + $0x20] sm:$0xf]
      %v157 = vld [vmem:[%s88 + $0x24] sm:$0xf]
      %v158 = vld [vmem:[%s88 + $0x28] sm:$0xf]
      %v159 = vld [vmem:[%s88 + $0x2c] sm:$0xf]
      %v160 = vld [vmem:[%s88 + $0x30] sm:$0xf]
      %v161 = vld [vmem:[%s88 + $0x34] sm:$0xf]
      %v162 = vld [vmem:[%s88 + $0x38] sm:$0xf]
      %v163 = vld [vmem:[%s88 + $0x3c] sm:$0xf]
      %v164 = vld [vmem:[%s101] sm:$0xf]
      %v165 = vld [vmem:[%s101 + $0x4] sm:$0xf]
      %v166 = vld [vmem:[%s101 + $0x8] sm:$0xf]
      %v167 = vld [vmem:[%s101 + $0xc] sm:$0xf]
      %v168 = vld [vmem:[%s101 + $0x10] sm:$0xf]
      %v169 = vld [vmem:[%s101 + $0x14] sm:$0xf]
      %v170 = vld [vmem:[%s101 + $0x18] sm:$0xf]
      %v171 = vld [vmem:[%s101 + $0x1c] sm:$0xf]
      %v172 = vld [vmem:[%s101 + $0x20] sm:$0xf]
      %v173 = vld [vmem:[%s101 + $0x24] sm:$0xf]
      %v174 = vld [vmem:[%s101 + $0x28] sm:$0xf]
      %v175 = vld [vmem:[%s101 + $0x2c] sm:$0xf]
      %v176 = vld [vmem:[%s101 + $0x30] sm:$0xf]
      %v177 = vld [vmem:[%s101 + $0x34] sm:$0xf]
      %v178 = vld [vmem:[%s101 + $0x38] sm:$0xf]
      %v179 = vld [vmem:[%s101 + $0x3c] sm:$0xf]
      %v196 = vunpack.c.l.b16 %v148
      %v197 = vunpack.c.l.b16 %v149
      %v198 = vunpack.c.l.b16 %v150
      %v199 = vunpack.c.l.b16 %v151
      %v200 = vunpack.c.l.b16 %v152
      %v201 = vunpack.c.l.b16 %v153
      %v202 = vunpack.c.l.b16 %v154
      %v203 = vunpack.c.l.b16 %v155
      %v204 = vunpack.c.l.b16 %v156
      %v205 = vunpack.c.l.b16 %v157
      %v206 = vunpack.c.l.b16 %v158
      %v207 = vunpack.c.l.b16 %v159
      %v208 = vunpack.c.l.b16 %v160
      %v209 = vunpack.c.l.b16 %v161
      %v210 = vunpack.c.l.b16 %v162
      %v211 = vunpack.c.l.b16 %v163
      %v212 = vpack.c.b16 %v197, %v196
      %v213 = vpack.c.b16 %v199, %v198
      %v214 = vpack.c.b16 %v201, %v200
      %v215 = vpack.c.b16 %v203, %v202
      %v216 = vpack.c.b16 %v205, %v204
      %v217 = vpack.c.b16 %v207, %v206
      %v218 = vpack.c.b16 %v209, %v208
      %v219 = vpack.c.b16 %v211, %v210
      %v244 = vunpack.c.l.b16 %v164
      %v245 = vunpack.c.l.b16 %v165
      %v246 = vunpack.c.l.b16 %v166
      %v247 = vunpack.c.l.b16 %v167
      %v248 = vunpack.c.l.b16 %v168
      %v249 = vunpack.c.l.b16 %v169
      %v250 = vunpack.c.l.b16 %v170
      %v251 = vunpack.c.l.b16 %v171
      %v252 = vunpack.c.l.b16 %v172
      %v253 = vunpack.c.l.b16 %v173
      %v254 = vunpack.c.l.b16 %v174
      %v255 = vunpack.c.l.b16 %v175
      %v256 = vunpack.c.l.b16 %v176
      %v257 = vunpack.c.l.b16 %v177
      %v258 = vunpack.c.l.b16 %v178
      %v259 = vunpack.c.l.b16 %v179
      %v260 = vpack.c.b16 %v245, %v244
      %v261 = vpack.c.b16 %v247, %v246
      %v262 = vpack.c.b16 %v249, %v248
      %v263 = vpack.c.b16 %v251, %v250
      %v264 = vpack.c.b16 %v253, %v252
      %v265 = vpack.c.b16 %v255, %v254
      %v266 = vpack.c.b16 %v257, %v256
      %v267 = vpack.c.b16 %v259, %v258
      %276 = vmatpush.bf16.msra.mxu0 %v267
      %277 = vmatpush.bf16.msra.mxu0 %v266
      %278 = vmatpush.bf16.msra.mxu0 %v265
      %279 = vmatpush.bf16.msra.mxu0 %v264
      %280 = vmatpush.bf16.msra.mxu0 %v263
      %281 = vmatpush.bf16.msra.mxu0 %v262
      %282 = vmatpush.bf16.msra.mxu0 %v261
      %283 = vmatpush.bf16.msra.mxu0 %v260
      %284 = vmatmul.bf16.gmra.mxu0 %v212
      %v285 = vpop.f32.mrf.mxu0
      %v286 = vadd.f32 0.0, %v285
      %v287 = vpop.f32.mrf.mxu0
      %v288 = vadd.f32 0.0, %v287
      %289 = vmatmul.bf16.gmra.mxu0 %v213
      %v290 = vpop.f32.mrf.mxu0
      %v291 = vadd.f32 0.0, %v290
      %v292 = vpop.f32.mrf.mxu0
      %v293 = vadd.f32 0.0, %v292
      %294 = vmatmul.bf16.gmra.mxu0 %v214
      %v295 = vpop.f32.mrf.mxu0
      %v296 = vadd.f32 0.0, %v295
      %v297 = vpop.f32.mrf.mxu0
      %v298 = vadd.f32 0.0, %v297
      %299 = vmatmul.bf16.gmra.mxu0 %v215
      %v300 = vpop.f32.mrf.mxu0
      %v301 = vadd.f32 0.0, %v300
      %v302 = vpop.f32.mrf.mxu0
      %v303 = vadd.f32 0.0, %v302
      %304 = vmatmul.bf16.gmra.mxu0 %v216
      %v305 = vpop.f32.mrf.mxu0
      %v306 = vadd.f32 0.0, %v305
      %v307 = vpop.f32.mrf.mxu0
      %v308 = vadd.f32 0.0, %v307
      %309 = vmatmul.bf16.gmra.mxu0 %v217
      %v310 = vpop.f32.mrf.mxu0
      %v311 = vadd.f32 0.0, %v310
      %v312 = vpop.f32.mrf.mxu0
      %v313 = vadd.f32 0.0, %v312
      %314 = vmatmul.bf16.gmra.mxu0 %v218
      %v315 = vpop.f32.mrf.mxu0
      %v316 = vadd.f32 0.0, %v315
      %v317 = vpop.f32.mrf.mxu0
      %v318 = vadd.f32 0.0, %v317
      %319 = vmatmul.bf16.gmra.mxu0 %v219
      %v320 = vpop.f32.mrf.mxu0
      %v321 = vadd.f32 0.0, %v320
      %v322 = vpop.f32.mrf.mxu0
      %v323 = vadd.f32 0.0, %v322
      %324 = vdwg.mxu0
      %v325 = vadd.f32 %v132, %v286
      %v326 = vadd.f32 %v133, %v288
      %v327 = vadd.f32 %v134, %v291
      %v328 = vadd.f32 %v135, %v293
      %v329 = vadd.f32 %v136, %v296
      %v330 = vadd.f32 %v137, %v298
      %v331 = vadd.f32 %v138, %v301
      %v332 = vadd.f32 %v139, %v303
      %v333 = vadd.f32 %v140, %v306
      %v334 = vadd.f32 %v141, %v308
      %v335 = vadd.f32 %v142, %v311
      %v336 = vadd.f32 %v143, %v313
      %v337 = vadd.f32 %v144, %v316
      %v338 = vadd.f32 %v145, %v318
      %v339 = vadd.f32 %v146, %v321
      %v340 = vadd.f32 %v147, %v323
      %341 = vst [vmem:[#allocation2] sm:$0xff] %v325
      %342 = vst [vmem:[#allocation2 + $0x8] sm:$0xff] %v326
      %343 = vst [vmem:[#allocation2 + $0x10] sm:$0xff] %v327
      %344 = vst [vmem:[#allocation2 + $0x18] sm:$0xff] %v328
      %345 = vst [vmem:[#allocation2 + $0x20] sm:$0xff] %v329
      %346 = vst [vmem:[#allocation2 + $0x28] sm:$0xff] %v330
      %347 = vst [vmem:[#allocation2 + $0x30] sm:$0xff] %v331
      %348 = vst [vmem:[#allocation2 + $0x38] sm:$0xff] %v332
      %349 = vst [vmem:[#allocation2 + $0x40] sm:$0xff] %v333
      %350 = vst [vmem:[#allocation2 + $0x48] sm:$0xff] %v334
      %351 = vst [vmem:[#allocation2 + $0x50] sm:$0xff] %v335
      %352 = vst [vmem:[#allocation2 + $0x58] sm:$0xff] %v336
      %353 = vst [vmem:[#allocation2 + $0x60] sm:$0xff] %v337
      %354 = vst [vmem:[#allocation2 + $0x68] sm:$0xff] %v338
      %355 = vst [vmem:[#allocation2 + $0x70] sm:$0xff] %v339
      %356 = vst [vmem:[#allocation2 + $0x78] sm:$0xff] %v340
    $region29: #{tpu_custom_call.1} parent=1 // pred_fallthru
      _
    // Predicated region
    $region30: #{tpu_custom_call.1} parent=1 // pred_check
      %p357 = pneg %p107
    $region31: #{tpu_custom_call.1} parent=1 // pred_check_branch
      %359 = sbr.rel (%p357) target = $region33
    $region32: #{tpu_custom_call.1} parent=1 // pred_region
      %v360 = vld [vmem:[#allocation2] sm:$0xff]
      %v361 = vld [vmem:[#allocation2 + $0x8] sm:$0xff]
      %v362 = vld [vmem:[#allocation2 + $0x10] sm:$0xff]
      %v363 = vld [vmem:[#allocation2 + $0x18] sm:$0xff]
      %v364 = vld [vmem:[#allocation2 + $0x20] sm:$0xff]
      %v365 = vld [vmem:[#allocation2 + $0x28] sm:$0xff]
      %v366 = vld [vmem:[#allocation2 + $0x30] sm:$0xff]
      %v367 = vld [vmem:[#allocation2 + $0x38] sm:$0xff]
      %v368 = vld [vmem:[#allocation2 + $0x40] sm:$0xff]
      %v369 = vld [vmem:[#allocation2 + $0x48] sm:$0xff]
      %v370 = vld [vmem:[#allocation2 + $0x50] sm:$0xff]
      %v371 = vld [vmem:[#allocation2 + $0x58] sm:$0xff]
      %v372 = vld [vmem:[#allocation2 + $0x60] sm:$0xff]
      %v373 = vld [vmem:[#allocation2 + $0x68] sm:$0xff]
      %v374 = vld [vmem:[#allocation2 + $0x70] sm:$0xff]
      %v375 = vld [vmem:[#allocation2 + $0x78] sm:$0xff]
      %v376 = vld [vmem:[%s4] sm:$0xff]
      %v377 = vld [vmem:[%s4 + $0x8] sm:$0xff]
      %v378 = vld [vmem:[%s4 + $0x10] sm:$0xff]
      %v379 = vld [vmem:[%s4 + $0x18] sm:$0xff]
      %v380 = vld [vmem:[%s4 + $0x20] sm:$0xff]
      %v381 = vld [vmem:[%s4 + $0x28] sm:$0xff]
      %v382 = vld [vmem:[%s4 + $0x30] sm:$0xff]
      %v383 = vld [vmem:[%s4 + $0x38] sm:$0xff]
      %v384 = vld [vmem:[%s4 + $0x40] sm:$0xff]
      %v385 = vld [vmem:[%s4 + $0x48] sm:$0xff]
      %v386 = vld [vmem:[%s4 + $0x50] sm:$0xff]
      %v387 = vld [vmem:[%s4 + $0x58] sm:$0xff]
      %v388 = vld [vmem:[%s4 + $0x60] sm:$0xff]
      %v389 = vld [vmem:[%s4 + $0x68] sm:$0xff]
      %v390 = vld [vmem:[%s4 + $0x70] sm:$0xff]
      %v391 = vld [vmem:[%s4 + $0x78] sm:$0xff]
      %393 = vset.pattern.permute.xlu0 0
      %394 = vperm.xlu0 %393, %v376
      %v395 = vpop.permute.xlu0 %394
      %398 = vset.pattern.permute.xlu0 0
      %399 = vperm.xlu0 %398, %v377
      %v400 = vpop.permute.xlu0 %399
      %403 = vset.pattern.permute.xlu0 0
      %404 = vperm.xlu0 %403, %v378
      %v405 = vpop.permute.xlu0 %404
      %408 = vset.pattern.permute.xlu0 0
      %409 = vperm.xlu0 %408, %v379
      %v410 = vpop.permute.xlu0 %409
      %413 = vset.pattern.permute.xlu0 0
      %414 = vperm.xlu0 %413, %v380
      %v415 = vpop.permute.xlu0 %414
      %418 = vset.pattern.permute.xlu0 0
      %419 = vperm.xlu0 %418, %v381
      %v420 = vpop.permute.xlu0 %419
      %423 = vset.pattern.permute.xlu0 0
      %424 = vperm.xlu0 %423, %v382
      %v425 = vpop.permute.xlu0 %424
      %428 = vset.pattern.permute.xlu0 0
      %429 = vperm.xlu0 %428, %v383
      %v430 = vpop.permute.xlu0 %429
      %433 = vset.pattern.permute.xlu0 0
      %434 = vperm.xlu0 %433, %v384
      %v435 = vpop.permute.xlu0 %434
      %438 = vset.pattern.permute.xlu0 0
      %439 = vperm.xlu0 %438, %v385
      %v440 = vpop.permute.xlu0 %439
      %443 = vset.pattern.permute.xlu0 0
      %444 = vperm.xlu0 %443, %v386
      %v445 = vpop.permute.xlu0 %444
      %448 = vset.pattern.permute.xlu0 0
      %449 = vperm.xlu0 %448, %v387
      %v450 = vpop.permute.xlu0 %449
      %453 = vset.pattern.permute.xlu0 0
      %454 = vperm.xlu0 %453, %v388
      %v455 = vpop.permute.xlu0 %454
      %458 = vset.pattern.permute.xlu0 0
      %459 = vperm.xlu0 %458, %v389
      %v460 = vpop.permute.xlu0 %459
      %463 = vset.pattern.permute.xlu0 0
      %464 = vperm.xlu0 %463, %v390
      %v465 = vpop.permute.xlu0 %464
      %468 = vset.pattern.permute.xlu0 0
      %469 = vperm.xlu0 %468, %v391
      %v470 = vpop.permute.xlu0 %469
      %v472 = vmul.f32 %v360, %v395
      %v473 = vmul.f32 %v361, %v400
      %v474 = vmul.f32 %v362, %v405
      %v475 = vmul.f32 %v363, %v410
      %v476 = vmul.f32 %v364, %v415
      %v477 = vmul.f32 %v365, %v420
      %v478 = vmul.f32 %v366, %v425
      %v479 = vmul.f32 %v367, %v430
      %v480 = vmul.f32 %v368, %v435
      %v481 = vmul.f32 %v369, %v440
      %v482 = vmul.f32 %v370, %v445
      %v483 = vmul.f32 %v371, %v450
      %v484 = vmul.f32 %v372, %v455
      %v485 = vmul.f32 %v373, %v460
      %v486 = vmul.f32 %v374, %v465
      %v487 = vmul.f32 %v375, %v470
      %v488 = vpack.c.bf16 %v473, %v472
      %v489 = vpack.c.bf16 %v475, %v474
      %v490 = vpack.c.bf16 %v477, %v476
      %v491 = vpack.c.bf16 %v479, %v478
      %v492 = vpack.c.bf16 %v481, %v480
      %v493 = vpack.c.bf16 %v483, %v482
      %v494 = vpack.c.bf16 %v485, %v484
      %v495 = vpack.c.bf16 %v487, %v486
      %v496 = vld [vmem:[#allocation6] sm:$0xf]
      %v497 = vld [vmem:[#allocation6 + $0x4] sm:$0xf]
      %v498 = vld [vmem:[#allocation6 + $0x8] sm:$0xf]
      %v499 = vld [vmem:[#allocation6 + $0xc] sm:$0xf]
      %v500 = vld [vmem:[#allocation6 + $0x10] sm:$0xf]
      %v501 = vld [vmem:[#allocation6 + $0x14] sm:$0xf]
      %v502 = vld [vmem:[#allocation6 + $0x18] sm:$0xf]
      %v503 = vld [vmem:[#allocation6 + $0x1c] sm:$0xf]
      %v504 = vld [vmem:[#allocation6 + $0x20] sm:$0xf]
      %v505 = vld [vmem:[#allocation6 + $0x24] sm:$0xf]
      %v506 = vld [vmem:[#allocation6 + $0x28] sm:$0xf]
      %v507 = vld [vmem:[#allocation6 + $0x2c] sm:$0xf]
      %v508 = vld [vmem:[#allocation6 + $0x30] sm:$0xf]
      %v509 = vld [vmem:[#allocation6 + $0x34] sm:$0xf]
      %v510 = vld [vmem:[#allocation6 + $0x38] sm:$0xf]
      %v511 = vld [vmem:[#allocation6 + $0x3c] sm:$0xf]
      %v528 = vunpack.c.l.b16 %v496
      %v529 = vunpack.c.l.b16 %v497
      %v530 = vunpack.c.l.b16 %v498
      %v531 = vunpack.c.l.b16 %v499
      %v532 = vunpack.c.l.b16 %v500
      %v533 = vunpack.c.l.b16 %v501
      %v534 = vunpack.c.l.b16 %v502
      %v535 = vunpack.c.l.b16 %v503
      %v536 = vunpack.c.l.b16 %v504
      %v537 = vunpack.c.l.b16 %v505
      %v538 = vunpack.c.l.b16 %v506
      %v539 = vunpack.c.l.b16 %v507
      %v540 = vunpack.c.l.b16 %v508
      %v541 = vunpack.c.l.b16 %v509
      %v542 = vunpack.c.l.b16 %v510
      %v543 = vunpack.c.l.b16 %v511
      %v544 = vpack.c.b16 %v529, %v528
      %v545 = vpack.c.b16 %v531, %v530
      %v546 = vpack.c.b16 %v533, %v532
      %v547 = vpack.c.b16 %v535, %v534
      %v548 = vpack.c.b16 %v537, %v536
      %v549 = vpack.c.b16 %v539, %v538
      %v550 = vpack.c.b16 %v541, %v540
      %v551 = vpack.c.b16 %v543, %v542
      %560 = vmatpush.bf16.msra.mxu0 %v551
      %561 = vmatpush.bf16.msra.mxu0 %v550
      %562 = vmatpush.bf16.msra.mxu0 %v549
      %563 = vmatpush.bf16.msra.mxu0 %v548
      %564 = vmatpush.bf16.msra.mxu0 %v547
      %565 = vmatpush.bf16.msra.mxu0 %v546
      %566 = vmatpush.bf16.msra.mxu0 %v545
      %567 = vmatpush.bf16.msra.mxu0 %v544
      %568 = vmatmul.bf16.gmra.mxu0 %v488
      %v569 = vpop.f32.mrf.mxu0
      %v570 = vadd.f32 0.0, %v569
      %v571 = vpop.f32.mrf.mxu0
      %v572 = vadd.f32 0.0, %v571
      %573 = vmatmul.bf16.gmra.mxu0 %v489
      %v574 = vpop.f32.mrf.mxu0
      %v575 = vadd.f32 0.0, %v574
      %v576 = vpop.f32.mrf.mxu0
      %v577 = vadd.f32 0.0, %v576
      %578 = vmatmul.bf16.gmra.mxu0 %v490
      %v579 = vpop.f32.mrf.mxu0
      %v580 = vadd.f32 0.0, %v579
      %v581 = vpop.f32.mrf.mxu0
      %v582 = vadd.f32 0.0, %v581
      %583 = vmatmul.bf16.gmra.mxu0 %v491
      %v584 = vpop.f32.mrf.mxu0
      %v585 = vadd.f32 0.0, %v584
      %v586 = vpop.f32.mrf.mxu0
      %v587 = vadd.f32 0.0, %v586
      %588 = vmatmul.bf16.gmra.mxu0 %v492
      %v589 = vpop.f32.mrf.mxu0
      %v590 = vadd.f32 0.0, %v589
      %v591 = vpop.f32.mrf.mxu0
      %v592 = vadd.f32 0.0, %v591
      %593 = vmatmul.bf16.gmra.mxu0 %v493
      %v594 = vpop.f32.mrf.mxu0
      %v595 = vadd.f32 0.0, %v594
      %v596 = vpop.f32.mrf.mxu0
      %v597 = vadd.f32 0.0, %v596
      %598 = vmatmul.bf16.gmra.mxu0 %v494
      %v599 = vpop.f32.mrf.mxu0
      %v600 = vadd.f32 0.0, %v599
      %v601 = vpop.f32.mrf.mxu0
      %v602 = vadd.f32 0.0, %v601
      %603 = vmatmul.bf16.gmra.mxu0 %v495
      %v604 = vpop.f32.mrf.mxu0
      %v605 = vadd.f32 0.0, %v604
      %v606 = vpop.f32.mrf.mxu0
      %v607 = vadd.f32 0.0, %v606
      %608 = vdwg.mxu0
      %609 = vst [vmem:[#allocation9] sm:$0xff] %v570
      %610 = vst [vmem:[#allocation9 + $0x8] sm:$0xff] %v572
      %611 = vst [vmem:[#allocation9 + $0x10] sm:$0xff] %v575
      %612 = vst [vmem:[#allocation9 + $0x18] sm:$0xff] %v577
      %613 = vst [vmem:[#allocation9 + $0x20] sm:$0xff] %v580
      %614 = vst [vmem:[#allocation9 + $0x28] sm:$0xff] %v582
      %615 = vst [vmem:[#allocation9 + $0x30] sm:$0xff] %v585
      %616 = vst [vmem:[#allocation9 + $0x38] sm:$0xff] %v587
      %617 = vst [vmem:[#allocation9 + $0x40] sm:$0xff] %v590
      %618 = vst [vmem:[#allocation9 + $0x48] sm:$0xff] %v592
      %619 = vst [vmem:[#allocation9 + $0x50] sm:$0xff] %v595
      %620 = vst [vmem:[#allocation9 + $0x58] sm:$0xff] %v597
      %621 = vst [vmem:[#allocation9 + $0x60] sm:$0xff] %v600
      %622 = vst [vmem:[#allocation9 + $0x68] sm:$0xff] %v602
      %623 = vst [vmem:[#allocation9 + $0x70] sm:$0xff] %v605
      %624 = vst [vmem:[#allocation9 + $0x78] sm:$0xff] %v607
    $region33: #{tpu_custom_call.1} parent=1 // pred_fallthru
      _
    // Predicated region
    $region34: #{tpu_custom_call.1} parent=1 // pred_check
      _
    $region35: #{tpu_custom_call.1} parent=1 // pred_check_branch
      %626 = sbr.rel (0) target = $region37
    $region36: #{tpu_custom_call.1} parent=1 // pred_region
      %628 = vsyncadd [#allocation8], 0
      %s629 = sshll.u32 [#allocation9], 4
      %s630 = int_to_ptr.vmem [resolvable:$true] %s629
      %s631 = sshll.u32 %s6, 4
      %s632 = int_to_ptr.hbm [resolvable:$true] %s631
      %637 = dma.vmem_to_hbm [thread:$0]  %s630, 2048, %s632, [#allocation8], 128, 128, 8
    $region37: #{tpu_custom_call.1} parent=1 // pred_fallthru
      _
    // Predicated region
    $region38: #{tpu_custom_call.1} parent=1 // pred_check
      _
    $region39: #{tpu_custom_call.1} parent=1 // pred_check_branch
      %639 = sbr.rel (0) target = $region41
    $region40: #{tpu_custom_call.1} parent=1 // pred_region
      %641 = dma.done [#allocation8], 2048
    $region41: #{tpu_custom_call.1} parent=1 // pred_fallthru
      _
    %642 = vsyncpa [#allocation7], 1
    %643 = vsyncpa [#allocation8], 1

</llo_original>
